<compile_context>
chip_gen: v5e
topology: v5e:2x2
jax: 0.10.0
libtpu: 0.0.40
codegen_flags: <defaults>
</compile_context>

<pallas_src>
import math
import functools

import jax
import jax.numpy as jnp
from jax.experimental import pallas as pl
from jax.experimental.pallas import tpu as pltpu


_SQRT_HALF = 1.0 / math.sqrt(2.0)
_GELU_TANH_C = math.sqrt(2.0 / math.pi)


def _gelu(h, tanh_approx):
    if tanh_approx:
        # tanh-approximate GELU: the tanh goes to the EUP (separate VLIW slot),
        # so the activation hides under the MXU on v6e/v7x.
        return 0.5 * h * (1.0 + jnp.tanh(_GELU_TANH_C * (h + 0.044715 * (h * h * h))))
    # Exact erf GELU (torch.nn.GELU() default numerics) -- VALU polynomial.
    return 0.5 * h * (1.0 + jax.lax.erf(h * _SQRT_HALF))


def _round_up(n, m):
    return ((n + m - 1) // m) * m


# ----------------------------------------------------------------------------
# Kernels
# ----------------------------------------------------------------------------
def _make_resident_kernel(H, hk, tanh_gelu):
    """Weights fully resident in VMEM; hidden dim chunked inside the body."""
    n_chunks = H // hk

    def kernel(x_ref, wfc_ref, bfc_ref, wproj_ref, bproj_ref, o_ref, acc_ref):
        # x_ref: (tm, D)  wfc_ref: (D, H)  bfc_ref: (1, H) f32
        # wproj_ref: (H, D)  bproj_ref: (1, D) f32  o_ref: (tm, D)
        # acc_ref: (tm, D) f32 VMEM scratch
        x = x_ref[...]
        acc_ref[...] = jnp.zeros_like(acc_ref)

        # Fully-unrolled chunk loop (equivalent to lax.fori_loop(unroll=True)
        # with static offsets -> static VMEM slices, no dynamic lane offsets).
        for c in range(n_chunks):
            off = c * hk
            # c_fc chunk: native-dtype operands on the MXU, f32 accumulation.
            h = jnp.dot(x, wfc_ref[:, off:off + hk],
                        preferred_element_type=jnp.float32)
            h = h + bfc_ref[:, off:off + hk]
            h = _gelu(h, tanh_gelu)
            # c_proj chunk, accumulated into the f32 VMEM scratch.
            acc_ref[...] += jnp.dot(h.astype(wproj_ref.dtype),
                                    wproj_ref[off:off + hk, :],
                                    preferred_element_type=jnp.float32)

        o_ref[...] = (acc_ref[...] + bproj_ref[...]).astype(o_ref.dtype)

    return kernel


def _make_htiled_kernel(tanh_gelu):
    """Hidden dim tiled as an 'arbitrary' grid axis; weights streamed."""

    def kernel(x_ref, wfc_ref, bfc_ref, wproj_ref, bproj_ref, o_ref, acc_ref):
        k = pl.program_id(1)

        @pl.when(k == 0)
        def _():
            acc_ref[...] = jnp.zeros_like(acc_ref)

        h = jnp.dot(x_ref[...], wfc_ref[...], preferred_element_type=jnp.float32)
        h = h + bfc_ref[...]
        h = _gelu(h, tanh_gelu)
        acc_ref[...] += jnp.dot(h.astype(wproj_ref.dtype), wproj_ref[...],
                                preferred_element_type=jnp.float32)

        @pl.when(k == pl.num_programs(1) - 1)
        def _():
            o_ref[...] = (acc_ref[...] + bproj_ref[...]).astype(o_ref.dtype)

    return kernel


# ----------------------------------------------------------------------------
# Tiling / VMEM heuristics
# ----------------------------------------------------------------------------
def _choose_h_chunk(H, target=512):
    """Smallest multiple-of-128 divisor of H that is >= max(target, H/8)."""
    if H <= 0 or H % 128 != 0:
        return H
    lo = max(target, -(-H // 8))
    best = H
    for k in range(1, H // 128 + 1):
        hk = 128 * k
        if H % hk == 0 and hk >= lo and hk < best:
            best = hk
    return best


def _pick_row_tile(M, tm, sublane):
    M_sub = _round_up(M, sublane)
    tm_cap = min(_round_up(tm, sublane), M_sub)
    # Prefer a tile that divides the sublane-rounded row count (no big pad copy).
    best = 0
    d = sublane
    while d <= tm_cap:
        if M_sub % d == 0:
            best = d
        d += sublane
    if best >= max(tm_cap // 2, min(tm_cap, 128)):
        tm_eff = best
    else:
        tm_eff = tm_cap
    M_pad = _round_up(M_sub, tm_eff)
    # v7x has 2 TensorCores: a 1-step "parallel" row grid idles one of them.
    if M_pad // tm_eff == 1:
        tm_half = _round_up(-(-M_pad // 2), sublane)
        if tm_half < M_pad:
            tm_eff = tm_half
            M_pad = _round_up(M_sub, tm_eff)
    return tm_eff, M_pad


def _vmem_capacity_bytes():
    try:
        info = pltpu.get_tpu_info()
        cap = getattr(info, "vmem_capacity_bytes", None)
        if cap:
            return int(cap)
    except Exception:
        pass
    return 64 << 20  # conservative fallback (v7x per-TC VMEM)


def _vmem_limit_bytes(resident, tm, D, H, hk, x_item, w_item, vmem_cap):
    if resident:
        weights = 2 * D * H * w_item            # W_fc + W_proj, single-buffered
    else:
        weights = 2 * 2 * D * hk * w_item       # streamed tiles, double-buffered
    biases = 2 * (H + D) * 4
    row_io = 2 * 2 * tm * D * x_item            # x + out tiles, double-buffered
    acc = tm * D * 4                            # f32 accumulator scratch
    interm = 2 * tm * hk * (4 + w_item)         # f32 hidden chunk + recast copy
    needed = int(1.3 * (weights + biases + row_io + acc + interm)) + (4 << 20)
    cap = int(0.8 * vmem_cap)                   # generation-aware headroom
    return min(max(needed, min(32 << 20, cap)), cap)


def _resident_spec_kwargs():
    # Weight/bias blocks never change across the grid: single-buffer them so
    # they do not double their VMEM footprint.  Fall back silently if this
    # JAX version's BlockSpec does not accept pipeline_mode.
    try:
        pl.BlockSpec((8, 128), lambda i: (0, 0), pipeline_mode=pl.Buffered(1))
        return dict(pipeline_mode=pl.Buffered(1))
    except Exception:
        return {}


# ----------------------------------------------------------------------------
# Public wrapper
# ----------------------------------------------------------------------------
@functools.partial(
    jax.jit,
    static_argnames=("tm", "tanh_gelu", "compute_dtype", "force_h_tiled", "h_tile"))
def mlp_forward(x, w_fc, b_fc, w_proj, b_proj, *, tm=512, tanh_gelu=True,
                compute_dtype=None, force_h_tiled=False, h_tile=None):
    """nanoGPT MLP forward.

    x: (..., D).  w_fc: (D, 4D), b_fc: (4D,), w_proj: (4D, D), b_proj: (D,).
    Weights are stored pre-transposed as (in, out) so the kernel computes plain
    row-major matmuls on the MXU, with f32 accumulation.

    tanh_gelu=True uses the tanh GELU approximation (fast path on v6e/v7x);
    set False for exact torch.nn.GELU() (erf) numerics.
    compute_dtype=jnp.bfloat16 casts x / weights at the boundary for the bf16
    MXU fast path (output stays in x's original dtype).
    """
    *lead, D = x.shape
    H = w_fc.shape[1]
    M = 1
    for s in lead:
        M *= s
    out_dtype = x.dtype

    if compute_dtype is not None:
        x = x.astype(compute_dtype)
        w_fc = w_fc.astype(compute_dtype)
        w_proj = w_proj.astype(compute_dtype)

    x_item = jnp.dtype(x.dtype).itemsize
    w_item = jnp.dtype(w_fc.dtype).itemsize

    sublane = max(8, 32 // x_item)
    tm_eff, M_pad = _pick_row_tile(M, tm, sublane)

    x2 = x.reshape(M, D)
    if M_pad != M:
        x2 = jnp.pad(x2, ((0, M_pad - M), (0, 0)))

    # Biases pre-cast to f32 once here, not per grid step inside the kernel.
    bfc2 = b_fc.astype(jnp.float32).reshape(1, H)
    bproj2 = b_proj.astype(jnp.float32).reshape(1, D)

    vmem_cap = _vmem_capacity_bytes()
    weight_bytes = 2 * D * H * w_item
    h_tiled = bool(force_h_tiled) or (weight_bytes > int(0.5 * vmem_cap))

    hk = h_tile if h_tile is not None else _choose_h_chunk(H)
    assert H % hk == 0, "hidden chunk must divide the hidden dimension"

    cost = pl.CostEstimate(
        flops=4 * M_pad * D * H,
        transcendentals=M_pad * H,
        bytes_accessed=2 * M * D * x_item + 2 * D * H * w_item + 4 * (H + D))

    n_rows = M_pad // tm_eff

    if not h_tiled:
        kernel = _make_resident_kernel(H, hk, tanh_gelu)
        resident = _resident_spec_kwargs()
        grid_spec = pltpu.PrefetchScalarGridSpec(
            num_scalar_prefetch=0,
            grid=(n_rows,),
            in_specs=[
                pl.BlockSpec((tm_eff, D), lambda i: (i, 0)),           # x rows
                pl.BlockSpec((D, H), lambda i: (0, 0), **resident),    # W_fc
                pl.BlockSpec((1, H), lambda i: (0, 0), **resident),    # b_fc
                pl.BlockSpec((H, D), lambda i: (0, 0), **resident),    # W_proj
                pl.BlockSpec((1, D), lambda i: (0, 0), **resident),    # b_proj
            ],
            out_specs=pl.BlockSpec((tm_eff, D), lambda i: (i, 0)),
            scratch_shapes=[pltpu.VMEM((tm_eff, D), jnp.float32)],
        )
        dim_sem = ("parallel",)
    else:
        kernel = _make_htiled_kernel(tanh_gelu)
        grid_spec = pltpu.PrefetchScalarGridSpec(
            num_scalar_prefetch=0,
            grid=(n_rows, H // hk),
            in_specs=[
                pl.BlockSpec((tm_eff, D), lambda i, k: (i, 0)),        # x rows
                pl.BlockSpec((D, hk), lambda i, k: (0, k)),            # W_fc tile
                pl.BlockSpec((1, hk), lambda i, k: (0, k)),            # b_fc tile
                pl.BlockSpec((hk, D), lambda i, k: (k, 0)),            # W_proj tile
                pl.BlockSpec((1, D), lambda i, k: (0, 0)),             # b_proj
            ],
            out_specs=pl.BlockSpec((tm_eff, D), lambda i, k: (i, 0)),
            scratch_shapes=[pltpu.VMEM((tm_eff, D), jnp.float32)],
        )
        dim_sem = ("parallel", "arbitrary")

    out2 = pl.pallas_call(
        kernel,
        out_shape=jax.ShapeDtypeStruct((M_pad, D), out_dtype),
        grid_spec=grid_spec,
        compiler_params=pltpu.CompilerParams(
            dimension_semantics=dim_sem,
            vmem_limit_bytes=_vmem_limit_bytes(
                not h_tiled, tm_eff, D, H, hk, x_item, w_item, vmem_cap)),
        cost_estimate=cost,
    )(x2, w_fc, bfc2, w_proj, bproj2)

    # Dropout: module evaluated in inference mode -> identity.
    # TODO(synk): training-mode dropout would need pltpu.prng_seed / prng_random_bits.

    if M_pad != M:
        out2 = out2[:M]
    return out2.reshape(*lead, D)


def reference_mlp(x, w_fc, b_fc, w_proj, b_proj, *, tanh_gelu=True):
    hp = jax.lax.Precision.HIGHEST
    h = jnp.einsum("...d,dh->...h", x, w_fc, precision=hp) + b_fc
    h = _gelu(h, tanh_gelu)
    y = jnp.einsum("...h,hd->...d", h, w_proj, precision=hp) + b_proj
    return y  # dropout is identity in eval / p=0


if __name__ == "__main__":
    key = jax.random.PRNGKey(0)

    def make_params(k, D, H, dtype=jnp.float32):
        k1, k2, k3, k4 = jax.random.split(k, 4)
        lim_fc = 1.0 / math.sqrt(D)
        lim_pj = 1.0 / math.sqrt(H)
        w_fc = jax.random.uniform(k1, (D, H), dtype, -lim_fc, lim_fc)
        b_fc = jax.random.uniform(k2, (H,), dtype, -lim_fc, lim_fc)
        w_pj = jax.random.uniform(k3, (H, D), dtype, -lim_pj, lim_pj)
        b_pj = jax.random.uniform(k4, (D,), dtype, -lim_pj, lim_pj)
        return w_fc, b_fc, w_pj, b_pj

    kx, kp, kx2, kp2 = jax.random.split(key, 4)

    # --- Path A: resident weights (nanoGPT-config-style toy shape) ----------
    B, T, D = 2, 8, 32
    H = 4 * D
    x = jax.random.normal(kx, (B, T, D), dtype=jnp.float32)
    w_fc, b_fc, w_pj, b_pj = make_params(kp, D, H)

    out = jax.block_until_ready(mlp_forward(x, w_fc, b_fc, w_pj, b_pj))
    ref = reference_mlp(x, w_fc, b_fc, w_pj, b_pj)
    assert out.shape == (B, T, D)
    # Tolerance covers MXU default-precision f32 matmul behaviour.
    assert jnp.allclose(out, ref, atol=5e-3, rtol=5e-3), "path A mismatch vs reference"

    # --- Path B: H-tiled reduction (streamed weights + f32 accumulator) -----
    B2, T2, D2 = 2, 16, 128
    H2 = 4 * D2
    x_b = jax.random.normal(kx2, (B2, T2, D2), dtype=jnp.float32)
    w_fc2, b_fc2, w_pj2, b_pj2 = make_params(kp2, D2, H2)

    out_b = jax.block_until_ready(
        mlp_forward(x_b, w_fc2, b_fc2, w_pj2, b_pj2,
                    force_h_tiled=True, h_tile=256))
    ref_b = reference_mlp(x_b, w_fc2, b_fc2, w_pj2, b_pj2)
    assert out_b.shape == (B2, T2, D2)
    assert jnp.allclose(out_b, ref_b, atol=5e-3, rtol=5e-3), "path B mismatch vs reference"

    print("KERNEL_OK")
</pallas_src>

<mosaic_0001>
module attributes {stable_mosaic.version = 11 : i64} {
  func.func @kernel(%arg0: i32, %arg1: memref<8x32xf32, #tpu.memory_space<vmem>>, %arg2: memref<32x128xf32, #tpu.memory_space<vmem>>, %arg3: memref<1x128xf32, #tpu.memory_space<vmem>>, %arg4: memref<128x32xf32, #tpu.memory_space<vmem>>, %arg5: memref<1x32xf32, #tpu.memory_space<vmem>>, %arg6: memref<8x32xf32, #tpu.memory_space<vmem>>, %arg7: memref<8x32xf32, #tpu.memory_space<vmem>>) attributes {dimension_semantics = [#tpu.dimension_semantics<parallel>], iteration_bounds = array<i64: 2>, scalar_prefetch = 0 : i64, scratch_operands = 1 : i64, tpu.core_type = #tpu.core_type<tc>, window_params = [{transform_indices = @transform_0, window_bounds = array<i64: 8, 32>}, {pipeline_mode = #tpu.pipeline_mode<synchronous>, transform_indices = @transform_1, window_bounds = array<i64: 32, 128>}, {pipeline_mode = #tpu.pipeline_mode<synchronous>, transform_indices = @transform_2, window_bounds = array<i64: 1, 128>}, {pipeline_mode = #tpu.pipeline_mode<synchronous>, transform_indices = @transform_3, window_bounds = array<i64: 128, 32>}, {pipeline_mode = #tpu.pipeline_mode<synchronous>, transform_indices = @transform_4, window_bounds = array<i64: 1, 32>}, {transform_indices = @transform_5, window_bounds = array<i64: 8, 32>}]} {
    %c0 = arith.constant 0 : index
    %c0_0 = arith.constant 0 : index
    %0 = vector.load %arg1[%c0, %c0_0] : memref<8x32xf32, #tpu.memory_space<vmem>>, vector<8x32xf32>
    %cst = arith.constant 0.000000e+00 : f32
    %1 = vector.broadcast %cst : f32 to vector<8x32xf32>
    %c0_1 = arith.constant 0 : index
    %c0_2 = arith.constant 0 : index
    %2 = vector.load %arg7[%c0_1, %c0_2] : memref<8x32xf32, #tpu.memory_space<vmem>>, vector<8x32xf32>
    tpu.vector_store %arg7[%c0_1, %c0_2], %1 {strides = array<i32>} : memref<8x32xf32, #tpu.memory_space<vmem>>, vector<8x32xf32>,
    %c0_3 = arith.constant 0 : index
    %c0_4 = arith.constant 0 : index
    %3 = vector.load %arg2[%c0_3, %c0_4] : memref<32x128xf32, #tpu.memory_space<vmem>>, vector<32x128xf32>
    %cst_5 = arith.constant dense<0.000000e+00> : vector<8x128xf32>
    %4 = tpu.matmul %0, %3, %cst_5 {dimension_numbers = #tpu.dot_dimension_numbers<[1], [0], [0], [1], [0, 0, 1, 1], [], []>} : vector<8x32xf32>, vector<32x128xf32>, vector<8x128xf32> -> vector<8x128xf32>
    %c0_6 = arith.constant 0 : index
    %c0_7 = arith.constant 0 : index
    %5 = vector.load %arg3[%c0_6, %c0_7] : memref<1x128xf32, #tpu.memory_space<vmem>>, vector<1x128xf32>
    %6 = vector.broadcast %5 : vector<1x128xf32> to vector<8x128xf32>
    %7 = arith.addf %4, %6 : vector<8x128xf32>
    %cst_8 = arith.constant 5.000000e-01 : f32
    %8 = vector.broadcast %cst_8 : f32 to vector<8x128xf32>
    %9 = arith.mulf %8, %7 : vector<8x128xf32>
    %10 = arith.mulf %7, %7 : vector<8x128xf32>
    %11 = arith.mulf %10, %7 : vector<8x128xf32>
    %cst_9 = arith.constant 4.471500e-02 : f32
    %12 = vector.broadcast %cst_9 : f32 to vector<8x128xf32>
    %13 = arith.mulf %12, %11 : vector<8x128xf32>
    %14 = arith.addf %7, %13 : vector<8x128xf32>
    %cst_10 = arith.constant 0.797884583 : f32
    %15 = vector.broadcast %cst_10 : f32 to vector<8x128xf32>
    %16 = arith.mulf %15, %14 : vector<8x128xf32>
    %17 = math.tanh %16 : vector<8x128xf32>
    %cst_11 = arith.constant 1.000000e+00 : f32
    %18 = vector.broadcast %cst_11 : f32 to vector<8x128xf32>
    %19 = arith.addf %18, %17 : vector<8x128xf32>
    %20 = arith.mulf %9, %19 : vector<8x128xf32>
    %c0_12 = arith.constant 0 : index
    %c0_13 = arith.constant 0 : index
    %21 = vector.load %arg7[%c0_12, %c0_13] : memref<8x32xf32, #tpu.memory_space<vmem>>, vector<8x32xf32>
    %c0_14 = arith.constant 0 : index
    %c0_15 = arith.constant 0 : index
    %22 = vector.load %arg4[%c0_14, %c0_15] : memref<128x32xf32, #tpu.memory_space<vmem>>, vector<128x32xf32>
    %cst_16 = arith.constant dense<0.000000e+00> : vector<8x32xf32>
    %23 = tpu.matmul %20, %22, %cst_16 {dimension_numbers = #tpu.dot_dimension_numbers<[1], [0], [0], [1], [0, 0, 1, 1], [], []>} : vector<8x128xf32>, vector<128x32xf32>, vector<8x32xf32> -> vector<8x32xf32>
    %24 = arith.addf %21, %23 : vector<8x32xf32>
    %c0_17 = arith.constant 0 : index
    %c0_18 = arith.constant 0 : index
    %25 = vector.load %arg7[%c0_17, %c0_18] : memref<8x32xf32, #tpu.memory_space<vmem>>, vector<8x32xf32>
    tpu.vector_store %arg7[%c0_17, %c0_18], %24 {strides = array<i32>} : memref<8x32xf32, #tpu.memory_space<vmem>>, vector<8x32xf32>,
    %c0_19 = arith.constant 0 : index
    %c0_20 = arith.constant 0 : index
    %26 = vector.load %arg7[%c0_19, %c0_20] : memref<8x32xf32, #tpu.memory_space<vmem>>, vector<8x32xf32>
    %c0_21 = arith.constant 0 : index
    %c0_22 = arith.constant 0 : index
    %27 = vector.load %arg5[%c0_21, %c0_22] : memref<1x32xf32, #tpu.memory_space<vmem>>, vector<1x32xf32>
    %28 = vector.broadcast %27 : vector<1x32xf32> to vector<8x32xf32>
    %29 = arith.addf %26, %28 : vector<8x32xf32>
    %c0_23 = arith.constant 0 : index
    %c0_24 = arith.constant 0 : index
    %30 = vector.load %arg6[%c0_23, %c0_24] : memref<8x32xf32, #tpu.memory_space<vmem>>, vector<8x32xf32>
    tpu.vector_store %arg6[%c0_23, %c0_24], %29 {strides = array<i32>} : memref<8x32xf32, #tpu.memory_space<vmem>>, vector<8x32xf32>,
    return
  }
  func.func @transform_0(%arg0: i32) -> (i32, i32) {
    %c0_i32 = arith.constant 0 : i32
    %c0_i32_0 = arith.constant 0 : i32
    return %arg0, %c0_i32 : i32, i32
  }
  func.func @transform_1(%arg0: i32) -> (i32, i32) {
    %c0_i32 = arith.constant 0 : i32
    %c0_i32_0 = arith.constant 0 : i32
    %c0_i32_1 = arith.constant 0 : i32
    return %c0_i32, %c0_i32_0 : i32, i32
  }
  func.func @transform_2(%arg0: i32) -> (i32, i32) {
    %c0_i32 = arith.constant 0 : i32
    %c0_i32_0 = arith.constant 0 : i32
    %c0_i32_1 = arith.constant 0 : i32
    return %c0_i32, %c0_i32_0 : i32, i32
  }
  func.func @transform_3(%arg0: i32) -> (i32, i32) {
    %c0_i32 = arith.constant 0 : i32
    %c0_i32_0 = arith.constant 0 : i32
    %c0_i32_1 = arith.constant 0 : i32
    return %c0_i32, %c0_i32_0 : i32, i32
  }
  func.func @transform_4(%arg0: i32) -> (i32, i32) {
    %c0_i32 = arith.constant 0 : i32
    %c0_i32_0 = arith.constant 0 : i32
    %c0_i32_1 = arith.constant 0 : i32
    return %c0_i32, %c0_i32_0 : i32, i32
  }
  func.func @transform_5(%arg0: i32) -> (i32, i32) {
    %c0_i32 = arith.constant 0 : i32
    %c0_i32_0 = arith.constant 0 : i32
    return %arg0, %c0_i32 : i32, i32
  }
}

</mosaic_0001>

<llo_original>
// kernel: mlp_forward.1
$region0: #{mlp_forward.1}
  #allocation0 [shape = 'u32[]', space=smem, size = 0x4, offset = 0x4, fixed_abs, tag = 'smem constant byte address 0x4 - core index']
  #allocation1 [shape = 'u32[72,128]{1,0:T(1,128)}', space=vmem, size = 0x9000, scoped, tag = 'internal scratch']
  #allocation2 [shape = 'f32[8,32]{1,0:T(8,128)}', space=vmem, size = 0x1000, scoped, tag = 'scratch operand']
  %s0 = inlined_call_operand.vmem [shape: f32[16,32], index: 0, kind: input, shape index: {}]
  %s1 = inlined_call_operand.vmem [shape: f32[32,128], index: 1, kind: input, shape index: {}]
  %s2 = inlined_call_operand.vmem [shape: f32[1,128], index: 2, kind: input, shape index: {}]
  %s3 = inlined_call_operand.vmem [shape: f32[128,32], index: 3, kind: input, shape index: {}]
  %s4 = inlined_call_operand.vmem [shape: f32[1,32], index: 4, kind: input, shape index: {}]
  %s5 = inlined_call_operand.hbm [shape: f32[16,32], index: 5, kind: output, shape index: {}]
  %s6 = sld [smem:[#allocation0]]
  $region53: #{mlp_forward.1} parent=0
    _
  %s8 = ssub.s32 1, %s6
  %s9 = scalar_select 0, %s8, %s6
  $region1: #{mlp_forward.1} parent=0
    #allocation3 [shape = 'u8[8192]{0}', space=vmem, size = 0x2000, scoped, tag = 'output window, operand 0']
    #allocation4 [shape = 's32[2]{0}', space=sflag, size = 0x8, scoped, tag = 'scoped memory for mlp_forward.1']
    %10 = vsyncpa [#allocation4], 0
    %s11 = scalar_lea.sflag [#allocation4], 1
    %12 = vsyncpa %s11, 0
    loop: start=0, step=1, limit=4
    $region2: #{mlp_forward.1} parent=1 // loop_pre_header
      _
    $region3: #{mlp_forward.1} parent=1 // loop_header
      %s14 = sphi 0, %s18
      %p15 = scmp.ge.s32.totalorder %s14, 4
      %s24 = sphi 0, %s26
      %s27 = sphi 0, %s24
      %s28 = sphi 0, %s27
      %s44 = sphi 0, %s28
      %s48 = sphi 0, %s48
      %s50 = sphi 0, %s48
      %s51 = sphi 0, %s50
      %s65 = sphi 0, %s51
      %s69 = sphi 0, %s69
      %s71 = sphi 0, %s69
      %s72 = sphi 0, %s71
      %s86 = sphi 0, %s72
      %s90 = sphi 0, %s90
      %s92 = sphi 0, %s90
      %s93 = sphi 0, %s92
      %s107 = sphi 0, %s93
      %s111 = sphi 0, %s111
      %s113 = sphi 0, %s111
      %s114 = sphi 0, %s113
      %s128 = sphi 0, %s114
      %s134 = sphi 0, %s136
      %s137 = sphi 0, %s134
      %s138 = sphi 0, %s137
      %s154 = sphi 0, %s138
    $region4: #{mlp_forward.1} parent=1 // loop_header_branch
      %17 = sbr.rel (%p15) target = $region8
    $region5: #{mlp_forward.1} parent=1 // loop_body
      %s19 = ssub.s32 %s14, 1
      %s20 = ssub.s32 %s14, 2
      %s21 = sadd.s32 %s14, 1
      %s22 = ssub.s32 %s14, %s21
      %p23 = scmp.eq.s32.totalorder %s22, 0
      %s25 = sadd.s32 %s24, 1
      %s26 = scalar_select %p23, %s24, %s25
      %p29 = pneg %p23
      %p30 = scmp.eq.s32.totalorder %s14, 1
      %p31 = por %p29, %p30
      %p32 = scmp.ne.s32.totalorder %s24, %s27
      %p33 = scmp.eq.s32.totalorder %s14, 0
      %p34 = por %p32, %p33
      %p35 = scmp.ne.s32.totalorder %s24, %s27
      %p36 = scmp.eq.s32.totalorder %s19, 1
      %p37 = por %p35, %p36
      %p38 = scmp.ne.s32.totalorder %s27, %s28
      %p39 = scmp.eq.s32.totalorder %s19, 0
      %p40 = por %p38, %p39
      %p41 = scmp.ne.s32.totalorder %s27, %s28
      %p42 = scmp.eq.s32.totalorder %s20, 1
      %p43 = por %p41, %p42
      %p45 = scmp.ne.s32.totalorder %s28, %s44
      %p46 = scmp.eq.s32.totalorder %s20, 0
      %p47 = por %p45, %p46
      %s49 = sadd.s32 %s48, 1
      %p52 = scmp.eq.s32.totalorder %s14, 1
      %p53 = scmp.ne.s32.totalorder %s48, %s50
      %p54 = scmp.eq.s32.totalorder %s14, 0
      %p55 = por %p53, %p54
      %p56 = scmp.ne.s32.totalorder %s48, %s50
      %p57 = scmp.eq.s32.totalorder %s19, 1
      %p58 = por %p56, %p57
      %p59 = scmp.ne.s32.totalorder %s50, %s51
      %p60 = scmp.eq.s32.totalorder %s19, 0
      %p61 = por %p59, %p60
      %p62 = scmp.ne.s32.totalorder %s50, %s51
      %p63 = scmp.eq.s32.totalorder %s20, 1
      %p64 = por %p62, %p63
      %p66 = scmp.ne.s32.totalorder %s51, %s65
      %p67 = scmp.eq.s32.totalorder %s20, 0
      %p68 = por %p66, %p67
      %s70 = sadd.s32 %s69, 1
      %p73 = scmp.eq.s32.totalorder %s14, 1
      %p74 = scmp.ne.s32.totalorder %s69, %s71
      %p75 = scmp.eq.s32.totalorder %s14, 0
      %p76 = por %p74, %p75
      %p77 = scmp.ne.s32.totalorder %s69, %s71
      %p78 = scmp.eq.s32.totalorder %s19, 1
      %p79 = por %p77, %p78
      %p80 = scmp.ne.s32.totalorder %s71, %s72
      %p81 = scmp.eq.s32.totalorder %s19, 0
      %p82 = por %p80, %p81
      %p83 = scmp.ne.s32.totalorder %s71, %s72
      %p84 = scmp.eq.s32.totalorder %s20, 1
      %p85 = por %p83, %p84
      %p87 = scmp.ne.s32.totalorder %s72, %s86
      %p88 = scmp.eq.s32.totalorder %s20, 0
      %p89 = por %p87, %p88
      %s91 = sadd.s32 %s90, 1
      %p94 = scmp.eq.s32.totalorder %s14, 1
      %p95 = scmp.ne.s32.totalorder %s90, %s92
      %p96 = scmp.eq.s32.totalorder %s14, 0
      %p97 = por %p95, %p96
      %p98 = scmp.ne.s32.totalorder %s90, %s92
      %p99 = scmp.eq.s32.totalorder %s19, 1
      %p100 = por %p98, %p99
      %p101 = scmp.ne.s32.totalorder %s92, %s93
      %p102 = scmp.eq.s32.totalorder %s19, 0
      %p103 = por %p101, %p102
      %p104 = scmp.ne.s32.totalorder %s92, %s93
      %p105 = scmp.eq.s32.totalorder %s20, 1
      %p106 = por %p104, %p105
      %p108 = scmp.ne.s32.totalorder %s93, %s107
      %p109 = scmp.eq.s32.totalorder %s20, 0
      %p110 = por %p108, %p109
      %s112 = sadd.s32 %s111, 1
      %p115 = scmp.eq.s32.totalorder %s14, 1
      %p116 = scmp.ne.s32.totalorder %s111, %s113
      %p117 = scmp.eq.s32.totalorder %s14, 0
      %p118 = por %p116, %p117
      %p119 = scmp.ne.s32.totalorder %s111, %s113
      %p120 = scmp.eq.s32.totalorder %s19, 1
      %p121 = por %p119, %p120
      %p122 = scmp.ne.s32.totalorder %s113, %s114
      %p123 = scmp.eq.s32.totalorder %s19, 0
      %p124 = por %p122, %p123
      %p125 = scmp.ne.s32.totalorder %s113, %s114
      %p126 = scmp.eq.s32.totalorder %s20, 1
      %p127 = por %p125, %p126
      %p129 = scmp.ne.s32.totalorder %s114, %s128
      %p130 = scmp.eq.s32.totalorder %s20, 0
      %p131 = por %p129, %p130
      %s132 = ssub.s32 %s14, %s21
      %p133 = scmp.eq.s32.totalorder %s132, 0
      %s135 = sadd.s32 %s134, 1
      %s136 = scalar_select %p133, %s134, %s135
      %p139 = pneg %p133
      %p140 = scmp.eq.s32.totalorder %s14, 1
      %p141 = por %p139, %p140
      %p142 = scmp.ne.s32.totalorder %s134, %s137
      %p143 = scmp.eq.s32.totalorder %s14, 0
      %p144 = por %p142, %p143
      %p145 = scmp.ne.s32.totalorder %s134, %s137
      %p146 = scmp.eq.s32.totalorder %s19, 1
      %p147 = por %p145, %p146
      %p148 = scmp.ne.s32.totalorder %s137, %s138
      %p149 = scmp.eq.s32.totalorder %s19, 0
      %p150 = por %p148, %p149
      %p151 = scmp.ne.s32.totalorder %s137, %s138
      %p152 = scmp.eq.s32.totalorder %s20, 1
      %p153 = por %p151, %p152
      %p155 = scmp.ne.s32.totalorder %s138, %s154
      %p156 = scmp.eq.s32.totalorder %s20, 0
      %p157 = por %p155, %p156
      %p158 = scmp.le.s32.totalorder 1, %s14
      %p159 = scmp.lt.s32.totalorder %s14, 3
      %p160 = pnand %p158, %p159
      %p161 = pneg %p160
      // Predicated region
      $region9: #{mlp_forward.1} parent=5 // pred_check
        _
      $region10: #{mlp_forward.1} parent=5 // pred_check_branch
        %163 = sbr.rel (%p160) target = $region12
      $region11: #{mlp_forward.1} parent=5 // pred_region
        %s164 = ssub.s32 %s14, 1
        // Predicated region
        $region13: #{mlp_forward.1} parent=11 // pred_check
          %p165 = pneg %p61
        $region14: #{mlp_forward.1} parent=11 // pred_check_branch
          %167 = sbr.rel (%p165) target = $region16
        $region15: #{mlp_forward.1} parent=11 // pred_region
          _
        $region16: #{mlp_forward.1} parent=11 // pred_fallthru
          _
        // Predicated region
        $region17: #{mlp_forward.1} parent=11 // pred_check
          %p168 = pneg %p82
        $region18: #{mlp_forward.1} parent=11 // pred_check_branch
          %170 = sbr.rel (%p168) target = $region20
        $region19: #{mlp_forward.1} parent=11 // pred_region
          _
        $region20: #{mlp_forward.1} parent=11 // pred_fallthru
          _
        // Predicated region
        $region21: #{mlp_forward.1} parent=11 // pred_check
          %p171 = pneg %p103
        $region22: #{mlp_forward.1} parent=11 // pred_check_branch
          %173 = sbr.rel (%p171) target = $region24
        $region23: #{mlp_forward.1} parent=11 // pred_region
          _
        $region24: #{mlp_forward.1} parent=11 // pred_fallthru
          _
        // Predicated region
        $region25: #{mlp_forward.1} parent=11 // pred_check
          %p174 = pneg %p124
        $region26: #{mlp_forward.1} parent=11 // pred_check_branch
          %176 = sbr.rel (%p174) target = $region28
        $region27: #{mlp_forward.1} parent=11 // pred_region
          _
        $region28: #{mlp_forward.1} parent=11 // pred_fallthru
          _
      $region12: #{mlp_forward.1} parent=5 // pred_fallthru
        _
      %p177 = scmp.lt.s32.totalorder %s14, 2
      // Predicated region
      $region29: #{mlp_forward.1} parent=5 // pred_check
        %p178 = pneg %p177
      $region30: #{mlp_forward.1} parent=5 // pred_check_branch
        %180 = sbr.rel (%p178) target = $region32
      $region31: #{mlp_forward.1} parent=5 // pred_region
        // Predicated region
        $region33: #{mlp_forward.1} parent=31 // pred_check
          %p181 = pneg %p34
        $region34: #{mlp_forward.1} parent=31 // pred_check_branch
          %183 = sbr.rel (%p181) target = $region36
        $region35: #{mlp_forward.1} parent=31 // pred_region
          %p184 = scmp.lt.s32.totalorder %s14, 1
          %s185 = scalar_select %p184, %s14, 1
          %s186 = smul.addr %s185, 8
          %s187 = scalar_lea.vmem %s0, %s186
        $region36: #{mlp_forward.1} parent=31 // pred_fallthru
          _
      $region32: #{mlp_forward.1} parent=5 // pred_fallthru
        _
      %p188 = scmp.le.s32.totalorder 1, %s14
      %p189 = scmp.lt.s32.totalorder %s14, 3
      %p190 = pnand %p188, %p189
      %p191 = pneg %p190
      // Predicated region
      $region37: #{mlp_forward.1} parent=5 // pred_check
        _
      $region38: #{mlp_forward.1} parent=5 // pred_check_branch
        %193 = sbr.rel (%p190) target = $region40
      $region39: #{mlp_forward.1} parent=5 // pred_region
        %s194 = ssub.s32 %s14, 1
        %p195 = scmp.lt.s32.totalorder %s19, 1
        %s196 = scalar_select %p195, %s19, 1
        %s197 = smul.addr %s196, 8
        %s198 = scalar_lea.vmem %s0, %s197
        %p199 = pneg %p40
        %p200 = pneg %p37
        %p201 = pneg %p61
        %p202 = pneg %p58
        %p203 = pneg %p82
        %p204 = pneg %p79
        %p205 = pneg %p103
        %p206 = pneg %p100
        %p207 = pneg %p124
        %p208 = pneg %p121
        %p209 = pneg %p150
        %p210 = pneg %p147
        %s211 = sand.u32 %s137, 1
        %s212 = scalar_lea.sflag [#allocation4], %s211
        %s213 = sand.u32 %s137, 1
        %s214 = smul.addr %s213, 8
        %s215 = scalar_lea.vmem [#allocation3], %s214
        %p216 = scmp.lt.s32.totalorder %s19, 1
        %s217 = scalar_select %p216, %s19, 1
        %s218 = smul.addr %s217, 8
        %s219 = scalar_lea.vmem %s0, %s218
        %v220 = vld [vmem:[%s219] sm:$0xff]
        %vm221 = vcmask 261120
        %222 = vst.msk [vmem:[#allocation2] sm:$0xff] %vm221, 0.0
        %v223 = vld [vmem:[%s1] sm:$0xff]
        %v224 = vld [vmem:[%s1 + $0x8] sm:$0xff]
        %v225 = vld [vmem:[%s1 + $0x10] sm:$0xff]
        %v226 = vld [vmem:[%s1 + $0x18] sm:$0xff]
        %v227 = vld [vmem:[%s2] sm:$0x1]
        %v229 = vperm.slane %v227, 0
        %v232 = vsel %vm221, %v220, 0
        %234 = vmatpush.msra.mxu0 0.0
        %235 = vmatpush.msra.mxu0 0.0
        %236 = vmatpush.msra.mxu0 0.0
        %237 = vmatpush.msra.mxu0 0.0
        %238 = vmatpush.msra.mxu0 0.0
        %239 = vmatpush.msra.mxu0 0.0
        %240 = vmatpush.msra.mxu0 0.0
        %241 = vmatpush.msra.mxu0 0.0
        %242 = vmatpush.msra.mxu0 0.0
        %243 = vmatpush.msra.mxu0 0.0
        %244 = vmatpush.msra.mxu0 0.0
        %245 = vmatpush.msra.mxu0 0.0
        %246 = vmatpush.msra.mxu0 %v226
        %247 = vmatpush.msra.mxu0 %v225
        %248 = vmatpush.msra.mxu0 %v224
        %249 = vmatpush.msra.mxu0 %v223
        %250 = vmatmul.f32.gmra.mxu0 %v232
        %v251 = vpop.f32.mrf.mxu0
        %v252 = vadd.f32 %v229, %v251
        %253 = vdwg.mxu0
        %v254 = vmul.f32 %v252, 0.5
        %v255 = vmul.f32 %v252, %v252
        %v256 = vmul.f32 %v255, %v252
        %v257 = vmul.f32 %v256, 0.044715
        %v258 = vadd.f32 %v252, %v257
        %v259 = vmul.f32 %v258, 0.7978846
        %v260 = vtanh.pop %v259
        %v261 = vadd.f32 %v260, 1.0
        %v262 = vmul.f32 %v254, %v261
        %v263 = vld [vmem:[#allocation2] sm:$0xff]
        %v264 = vld [vmem:[%s3] sm:$0xff]
        %v265 = vld [vmem:[%s3 + $0x8] sm:$0xff]
        %v266 = vld [vmem:[%s3 + $0x10] sm:$0xff]
        %v267 = vld [vmem:[%s3 + $0x18] sm:$0xff]
        %v268 = vld [vmem:[%s3 + $0x20] sm:$0xff]
        %v269 = vld [vmem:[%s3 + $0x28] sm:$0xff]
        %v270 = vld [vmem:[%s3 + $0x30] sm:$0xff]
        %v271 = vld [vmem:[%s3 + $0x38] sm:$0xff]
        %v272 = vld [vmem:[%s3 + $0x40] sm:$0xff]
        %v273 = vld [vmem:[%s3 + $0x48] sm:$0xff]
        %v274 = vld [vmem:[%s3 + $0x50] sm:$0xff]
        %v275 = vld [vmem:[%s3 + $0x58] sm:$0xff]
        %v276 = vld [vmem:[%s3 + $0x60] sm:$0xff]
        %v277 = vld [vmem:[%s3 + $0x68] sm:$0xff]
        %v278 = vld [vmem:[%s3 + $0x70] sm:$0xff]
        %v279 = vld [vmem:[%s3 + $0x78] sm:$0xff]
        %280 = vmatpush.msra.mxu0 %v279
        %281 = vmatpush.msra.mxu0 %v278
        %282 = vmatpush.msra.mxu0 %v277
        %283 = vmatpush.msra.mxu0 %v276
        %284 = vmatpush.msra.mxu0 %v275
        %285 = vmatpush.msra.mxu0 %v274
        %286 = vmatpush.msra.mxu0 %v273
        %287 = vmatpush.msra.mxu0 %v272
        %288 = vmatpush.msra.mxu0 %v271
        %289 = vmatpush.msra.mxu0 %v270
        %290 = vmatpush.msra.mxu0 %v269
        %291 = vmatpush.msra.mxu0 %v268
        %292 = vmatpush.msra.mxu0 %v267
        %293 = vmatpush.msra.mxu0 %v266
        %294 = vmatpush.msra.mxu0 %v265
        %295 = vmatpush.msra.mxu0 %v264
        %296 = vmatmul.f32.gmra.mxu0 %v262
        %v297 = vpop.f32.mrf.mxu0
        %v298 = vadd.f32 0.0, %v297
        %299 = vdwg.mxu0
        %v300 = vadd.f32 %v263, %v298
        %301 = vst.msk [vmem:[#allocation2] sm:$0xff] %vm221, %v300
        %v302 = vld [vmem:[#allocation2] sm:$0xff]
        %v303 = vld [vmem:[%s4] sm:$0x1]
        %v305 = vperm.slane %v303, 0
        %v307 = vadd.f32 %v302, %v305
        %308 = vst.msk [vmem:[%s215] sm:$0xff] %vm221, %v307
        %s309 = sand.u32 %s137, 1
        %s310 = scalar_lea.sflag [#allocation4], %s309
        %s311 = sand.u32 %s137, 1
        %s312 = smul.addr %s311, 8
        %s313 = scalar_lea.vmem [#allocation3], %s312
        // Predicated region
        $region41: #{mlp_forward.1} parent=39 // pred_check
          %p314 = pneg %p147
        $region42: #{mlp_forward.1} parent=39 // pred_check_branch
          %316 = sbr.rel (%p314) target = $region44
        $region43: #{mlp_forward.1} parent=39 // pred_region
          %318 = vsyncadd %s310, 0
          %s319 = smul.addr %s19, 8
          %s320 = scalar_lea.hbm %s5, %s319
          %s322 = sshll.u32 %s313, 4
          %s323 = int_to_ptr.vmem [resolvable:$true] %s322
          %s324 = sshll.u32 %s320, 4
          %s325 = int_to_ptr.hbm [resolvable:$true] %s324
          %327 = dma.vmem_to_hbm [thread:$0]  %s323, 128, %s325, %s310
        $region44: #{mlp_forward.1} parent=39 // pred_fallthru
          _
      $region40: #{mlp_forward.1} parent=5 // pred_fallthru
        _
      %p328 = scmp.le.s32.totalorder 2, %s14
      // Predicated region
      $region45: #{mlp_forward.1} parent=5 // pred_check
        %p329 = pneg %p328
      $region46: #{mlp_forward.1} parent=5 // pred_check_branch
        %331 = sbr.rel (%p329) target = $region48
      $region47: #{mlp_forward.1} parent=5 // pred_region
        %s332 = ssub.s32 %s14, 2
        // Predicated region
        $region49: #{mlp_forward.1} parent=47 // pred_check
          %p333 = pneg %p153
        $region50: #{mlp_forward.1} parent=47 // pred_check_branch
          %335 = sbr.rel (%p333) target = $region52
        $region51: #{mlp_forward.1} parent=47 // pred_region
          %s336 = sand.u32 %s138, 1
          %s337 = scalar_lea.sflag [#allocation4], %s336
          %s338 = sand.u32 %s138, 1
          %s339 = smul.addr %s338, 8
          %s340 = scalar_lea.vmem [#allocation3], %s339
          %342 = dma.done %s337, 128
        $region52: #{mlp_forward.1} parent=47 // pred_fallthru
          _
      $region48: #{mlp_forward.1} parent=5 // pred_fallthru
        _
    $region6: #{mlp_forward.1} parent=1 // loop_footer
      %s18 = sadd.s32 1, %s14
    $region7: #{mlp_forward.1} parent=1 // loop_footer_branch
      %13 = sbr.rel target = $region3
    $region8: #{mlp_forward.1} parent=1 // loop_exit
      _
    %343 = vsyncpa [#allocation4], 1
    %s344 = scalar_lea.sflag [#allocation4], 1
    %345 = vsyncpa %s344, 1

</llo_original>
